<compile_context>
chip_gen: v7x
topology: tpu7x:2x2x1
jax: 0.10.0
libtpu: 0.0.40
codegen_flags: <defaults>
</compile_context>

<pallas_src>
import math

import jax
import jax.numpy as jnp
from jax.experimental import pallas as pl
from jax.experimental.pallas import tpu as pltpu


def _round_up(x: int, m: int) -> int:
    return ((x + m - 1) // m) * m


def _cdiv(a: int, b: int) -> int:
    return -(-a // b)


def _inv_softmax_eta_kernel(s_ref, o_ref, *, log_eta: float):
    # Elementwise hot path.  Math stays in the input dtype; the single EUP
    # transcendental (log) is the only work besides the streaming DMA.
    s = s_ref[...]
    if log_eta == 0.0:
        o_ref[...] = jnp.log(s)
    else:
        o_ref[...] = jnp.log(s) - log_eta   # weak scalar: no dtype promotion


def inv_softmax_eta(
    s,
    eta: float = 1.0,
    epsilon: float = 1e-6,  # unused in forward (parity with the reference)
    *,
    lane_width: int = 512,               # lane-dense slab width (multiple of 128)
    tile_target_bytes: int = 8 << 20,    # ~8 MiB per block -> 4x live = 32 MiB
    min_pallas_elems: int = 1 << 20,     # small-input fast path threshold
    min_grid_blocks: int = 8,            # keep pipeline + 2-TC sharding alive
    force_pallas: bool = False,
):
    """Pallas implementation of InvSoftmaxEta.forward: log(s / eta)."""
    assert lane_width % 128 == 0, "lane_width must be a multiple of 128"

    orig_shape = s.shape
    orig_dtype = s.dtype
    log_eta = float(math.log(eta))

    flat = s.reshape(-1)
    n = flat.shape[0]

    # Small-input fast path: XLA fuses this for free; pallas_call setup would
    # dominate for typical singular-value vectors.
    if not force_pallas and n < min_pallas_elems:
        return (jnp.log(flat) - log_eta).astype(orig_dtype).reshape(orig_shape)

    cols = lane_width
    itemsize = jnp.dtype(orig_dtype).itemsize
    # Native sublane packing: 8 rows for f32, 16 for bf16, 32 for int8/fp8.
    sub = max(8, 32 // itemsize)

    rows_needed = _cdiv(n, cols)
    rows_padded = _round_up(rows_needed, sub)   # sublane alignment only, not tm
    pad = rows_padded * cols - n

    if pad:
        # Pad value 1.0 -> log is finite; padded results are sliced off below.
        flat = jnp.pad(flat, (0, pad), constant_values=1.0)
    slab = flat.reshape(rows_padded, cols)

    # Row tile: largest sublane-aligned tile within the VMEM budget, but small
    # enough that the grid has >= min_grid_blocks steps (pipelining + megacore).
    tm_cap = max(sub, (tile_target_bytes // (cols * itemsize)) // sub * sub)
    tm_for_min_blocks = _round_up(_cdiv(rows_padded, min_grid_blocks), sub)
    tm = max(sub, min(tm_cap, tm_for_min_blocks))
    grid = (_cdiv(rows_padded, tm),)
    # NOTE: if rows_padded % tm != 0 the last block is partial; Pallas clips the
    # DMA, the stale tail of that block may produce NaN under log, but those
    # lanes are never stored back (no trap on TPU).

    n_padded = rows_padded * cols
    cost = pl.CostEstimate(
        flops=0 if log_eta == 0.0 else n_padded,
        transcendentals=n_padded,
        bytes_accessed=2 * n_padded * itemsize,
    )

    kernel = lambda s_ref, o_ref: _inv_softmax_eta_kernel(
        s_ref, o_ref, log_eta=log_eta
    )

    out = pl.pallas_call(
        kernel,
        out_shape=jax.ShapeDtypeStruct((rows_padded, cols), orig_dtype),
        grid_spec=pltpu.PrefetchScalarGridSpec(
            num_scalar_prefetch=0,
            grid=grid,
            in_specs=[pl.BlockSpec((tm, cols), lambda i: (i, 0))],
            out_specs=pl.BlockSpec((tm, cols), lambda i: (i, 0)),
        ),
        compiler_params=pltpu.CompilerParams(
            # Rows are independent -> megacore-shardable on v7x.
            dimension_semantics=("parallel",),
            # 4 live ~8 MiB buffers + headroom; <= 64 MiB physical VMEM on v7x.
            vmem_limit_bytes=48 * 1024 * 1024,
        ),
        cost_estimate=cost,
        # Donate the slab only when it is a fresh padded temporary (safe even in
        # eager mode); when pad == 0 the slab may share the caller's buffer.
        input_output_aliases=({0: 0} if pad else {}),
    )(slab)

    if pad:
        return out.reshape(-1)[:n].reshape(orig_shape)
    # Aligned case: no pad, no slice -> truly single-pass.
    return out.reshape(orig_shape)


if __name__ == "__main__":
    key = jax.random.PRNGKey(0)
    k1, k2, k3, k4, k5 = jax.random.split(key, 5)

    # 1) Small module-like shape, forced through the Pallas path: ragged size
    #    -> minimal sublane padding, single (8, 512) block.
    x_small = jax.random.uniform(
        k1, (2, 4, 16, 16), dtype=jnp.float32, minval=0.05, maxval=1.0
    )
    y_small = jax.block_until_ready(
        inv_softmax_eta(x_small, eta=1.0, force_pallas=True)
    )
    assert y_small.shape == x_small.shape
    assert jnp.allclose(y_small, jnp.log(x_small), atol=1e-5, rtol=1e-5)

    # 2) Aligned medium input: no-pad/no-slice single-pass path, multi-block
    #    grid (8 blocks -> pipelined, 2-TC shardable) and nontrivial eta.
    eta = 2.0
    x_big = jax.random.uniform(
        k2, (4, 1024, 512), dtype=jnp.float32, minval=0.05, maxval=1.0
    )
    y_big = jax.block_until_ready(inv_softmax_eta(x_big, eta=eta))
    assert jnp.allclose(y_big, jnp.log(x_big / eta), atol=1e-5, rtol=1e-5)

    # 3) Partial-last-block path: 72 rows, tm=16 -> grid=(5,), last block clipped.
    x_part = jax.random.uniform(
        k3, (9, 64, 64), dtype=jnp.float32, minval=0.05, maxval=1.0
    )
    y_part = jax.block_until_ready(
        inv_softmax_eta(x_part, eta=eta, force_pallas=True)
    )
    assert jnp.allclose(y_part, jnp.log(x_part / eta), atol=1e-5, rtol=1e-5)

    # 4) bf16: exercises 16-row sublane alignment (unmasked stores).
    x_bf16 = jax.random.uniform(
        k4, (8, 32, 32), dtype=jnp.float32, minval=0.05, maxval=1.0
    ).astype(jnp.bfloat16)
    y_bf16 = jax.block_until_ready(
        inv_softmax_eta(x_bf16, eta=eta, force_pallas=True)
    )
    assert y_bf16.dtype == jnp.bfloat16
    ref_bf16 = jnp.log(x_bf16.astype(jnp.float32) / eta)
    assert jnp.allclose(
        y_bf16.astype(jnp.float32), ref_bf16, atol=5e-2, rtol=5e-2
    )

    # 5) Tiny singular-value vector: plain-XLA fast path (fusion-friendly).
    x_tiny = jax.random.uniform(
        k5, (7,), dtype=jnp.float32, minval=0.05, maxval=1.0
    )
    y_tiny = jax.block_until_ready(inv_softmax_eta(x_tiny, eta=1.0))
    assert jnp.allclose(y_tiny, jnp.log(x_tiny), atol=1e-6, rtol=1e-6)

    print("KERNEL_OK")
</pallas_src>

<mosaic_0001>
module attributes {stable_mosaic.version = 11 : i64} {
  func.func @_lambda_(%arg0: i32, %arg1: memref<8x512xf32, #tpu.memory_space<vmem>>, %arg2: memref<8x512xf32, #tpu.memory_space<vmem>>) attributes {dimension_semantics = [#tpu.dimension_semantics<parallel>], iteration_bounds = array<i64: 1>, scalar_prefetch = 0 : i64, scratch_operands = 0 : i64, tpu.core_type = #tpu.core_type<tc>, window_params = [{transform_indices = @transform_0, window_bounds = array<i64: 8, 512>}, {transform_indices = @transform_1, window_bounds = array<i64: 8, 512>}]} {
    %c0 = arith.constant 0 : index
    %c0_0 = arith.constant 0 : index
    %0 = vector.load %arg1[%c0, %c0_0] : memref<8x512xf32, #tpu.memory_space<vmem>>, vector<8x512xf32>
    %1 = math.log %0 : vector<8x512xf32>
    %c0_1 = arith.constant 0 : index
    %c0_2 = arith.constant 0 : index
    %2 = vector.load %arg2[%c0_1, %c0_2] : memref<8x512xf32, #tpu.memory_space<vmem>>, vector<8x512xf32>
    tpu.vector_store %arg2[%c0_1, %c0_2], %1 {strides = array<i32>} : memref<8x512xf32, #tpu.memory_space<vmem>>, vector<8x512xf32>,
    return
  }
  func.func @transform_0(%arg0: i32) -> (i32, i32) {
    %c0_i32 = arith.constant 0 : i32
    %c0_i32_0 = arith.constant 0 : i32
    return %arg0, %c0_i32 : i32, i32
  }
  func.func @transform_1(%arg0: i32) -> (i32, i32) {
    %c0_i32 = arith.constant 0 : i32
    %c0_i32_0 = arith.constant 0 : i32
    return %arg0, %c0_i32 : i32, i32
  }
}

</mosaic_0001>

<llo_original>
// kernel: tpu_custom_call.1
$region0: #{tpu_custom_call.1}
  #allocation0 [shape = 'u32[]', space=smem, size = 0x4, offset = 0x4, fixed_abs, tag = 'smem constant byte address 0x4 - core index']
  #allocation1 [shape = 'u32[144,128]{1,0:T(1,128)}', space=vmem, size = 0x12000, scoped, tag = 'internal scratch']
  %s0 = inlined_call_operand.hbm [shape: f32[8,512], index: 0, kind: input, shape index: {}, may-alias: {0,1}]
  %s1 = inlined_call_operand.hbm [shape: f32[8,512], index: 1, kind: output, shape index: {}, may-alias: {0,1}]
  %s2 = sld [smem:[#allocation0]]
  $region18: #{tpu_custom_call.1} parent=0
    _
  %s4 = ssub.s32 1, %s2
  %s5 = scalar_select 0, %s4, %s2
  $region1: #{tpu_custom_call.1} parent=0
    #allocation2 [shape = 'u8[16384]{0}', space=vmem, size = 0x4000, scoped, tag = 'input window, operand 0, single buffered']
    #allocation3 [shape = 's32[1]{0}', space=sflag, size = 0x4, scoped, tag = 'scoped memory for tpu_custom_call.1']
    #allocation4 [shape = 's32[1]{0}', space=sflag, size = 0x4, scoped, tag = 'scoped memory for tpu_custom_call.1']
    #allocation5 [shape = 'u8[16384]{0}', space=vmem, size = 0x4000, scoped, tag = 'output window, operand 0, single buffered']
    %6 = vsyncpa [#allocation3], 0
    %7 = vsyncpa [#allocation4], 0
    // Predicated region
    $region2: #{tpu_custom_call.1} parent=1 // pred_check
      _
    $region3: #{tpu_custom_call.1} parent=1 // pred_check_branch
      %9 = sbr.rel (0) target = $region5
    $region4: #{tpu_custom_call.1} parent=1 // pred_region
      %s11 = ssub.s32 512, 512
      %12 = vsyncadd [#allocation3], %s11
      %s14 = sshll.u32 [#allocation2], 4
      %s15 = int_to_ptr.vmem [resolvable:$true] %s14
      %17 = dma.hbm_to_vmem [thread:$0]  %s0, 512, %s15, [#allocation3]
    $region5: #{tpu_custom_call.1} parent=1 // pred_fallthru
      _
    // Predicated region
    $region6: #{tpu_custom_call.1} parent=1 // pred_check
      _
    $region7: #{tpu_custom_call.1} parent=1 // pred_check_branch
      %19 = sbr.rel (0) target = $region9
    $region8: #{tpu_custom_call.1} parent=1 // pred_region
      %20 = dma.done [#allocation3], 512
    $region9: #{tpu_custom_call.1} parent=1 // pred_fallthru
      _
    %v21 = vld [vmem:[#allocation2] sm:$0xff]
    %v22 = vld [vmem:[#allocation2 + $0x8] sm:$0xff]
    %v23 = vld [vmem:[#allocation2 + $0x10] sm:$0xff]
    %v24 = vld [vmem:[#allocation2 + $0x18] sm:$0xff]
    %v25 = vlog2.pop %v21
    %v26 = vmul.f32 %v25, 0.6931472
    %v27 = vlog2.pop %v22
    %v28 = vmul.f32 %v27, 0.6931472
    %v29 = vlog2.pop %v23
    %v30 = vmul.f32 %v29, 0.6931472
    %v31 = vlog2.pop %v24
    %v32 = vmul.f32 %v31, 0.6931472
    %33 = vst [vmem:[#allocation5] sm:$0xff] %v26
    %34 = vst [vmem:[#allocation5 + $0x8] sm:$0xff] %v28
    %35 = vst [vmem:[#allocation5 + $0x10] sm:$0xff] %v30
    %36 = vst [vmem:[#allocation5 + $0x18] sm:$0xff] %v32
    // Predicated region
    $region10: #{tpu_custom_call.1} parent=1 // pred_check
      _
    $region11: #{tpu_custom_call.1} parent=1 // pred_check_branch
      %38 = sbr.rel (0) target = $region13
    $region12: #{tpu_custom_call.1} parent=1 // pred_region
      %s40 = ssub.s32 512, 512
      %41 = vsyncadd [#allocation4], %s40
      %s43 = sshll.u32 [#allocation5], 4
      %s44 = int_to_ptr.vmem [resolvable:$true] %s43
      %46 = dma.vmem_to_hbm [thread:$0]  %s44, 512, %s1, [#allocation4]
    $region13: #{tpu_custom_call.1} parent=1 // pred_fallthru
      _
    // Predicated region
    $region14: #{tpu_custom_call.1} parent=1 // pred_check
      _
    $region15: #{tpu_custom_call.1} parent=1 // pred_check_branch
      %48 = sbr.rel (0) target = $region17
    $region16: #{tpu_custom_call.1} parent=1 // pred_region
      %49 = dma.done [#allocation4], 512
    $region17: #{tpu_custom_call.1} parent=1 // pred_fallthru
      _
    %50 = vsyncpa [#allocation3], 1
    %51 = vsyncpa [#allocation4], 1

</llo_original>
